<compile_context>
chip_gen: v7x
topology: tpu7x:2x2x1
jax: 0.10.0
libtpu: 0.0.40
codegen_flags: <defaults>
</compile_context>

<pallas_src>
import jax
import jax.numpy as jnp
from jax import lax
from jax.experimental import pallas as pl
from jax.experimental.pallas import tpu as pltpu


_EPS_SQ = 1e-24  # (1e-12)**2 : F.normalize eps applied to the squared norm.


def _round_up(x, m):
    return (x + m - 1) // m * m


def _ncl_tile_kernel(fi_ref, fj_ref, lab_col_ref, lab_row_ref, psum_ref):
    """One (i, j) tile of the masked similarity sum.

    psum_ref is a lane-dense (Ti, 128) accumulator, resident across the j
    ('arbitrary') grid axis.  Only upper-triangular tiles (j >= i) are
    computed; off-diagonal tiles contribute twice (sim and mask are symmetric
    and only the full-matrix scalar sum is needed).
    """
    i = pl.program_id(0)
    j = pl.program_id(1)

    @pl.when(j == 0)
    def _init():
        psum_ref[...] = jnp.zeros_like(psum_ref)

    @pl.when(j >= i)
    def _compute():
        # Unscaled cosine similarities: contract the feature axis of both
        # (pre-normalized) operands on the MXU, f32 accumulation, no transpose.
        sim = lax.dot_general(
            fi_ref[...], fj_ref[...],
            dimension_numbers=(((1,), (1,)), ((), ())),
            preferred_element_type=jnp.float32)              # (Ti, Tj) f32

        # Positive-pair mask (diagonal still included; removed analytically in
        # the wrapper).  Padded rows/cols have zero features -> sim == 0, so
        # no validity masking is needed.
        eq = lab_col_ref[...] == lab_row_ref[...]            # (Ti,1)==(1,Tj)
        masked = jnp.where(eq, sim, 0.0)

        # Lane-dense fold: VPU adds across 128-lane groups (no cross-lane XLU
        # reduce, no narrow masked stores).  Tj is a static multiple of 128.
        tj = masked.shape[1]
        folded = masked[:, 0:128]
        for g in range(1, tj // 128):
            folded = folded + masked[:, g * 128:(g + 1) * 128]

        # Off-diagonal tiles count twice (symmetry).
        scale = jnp.where(j == i, jnp.float32(1.0), jnp.float32(2.0))
        psum_ref[...] += scale * folded


def _choose_tile(batch, d_padded):
    """Row/col tile size (always a multiple of 128), adapted to D and batch."""
    if d_padded <= 1024:
        pref = 512      # big tiles amortize per-step overhead (v5e/v6e)
    elif d_padded <= 2048:
        pref = 256      # keep double-buffered fi+fj inside v7x's 64 MiB VMEM
    else:
        pref = 128
    tile = 128
    for cand in (512, 256, 128):
        if cand > pref:
            continue
        pad = _round_up(batch, cand) - batch
        if pad <= max(batch // 8, 128):   # bound padded (wasted) work
            tile = cand
            break
    # Give the 'parallel' row axis >= 2 tiles so v7x megacore can split it.
    if _round_up(batch, tile) // tile < 2 and _round_up(batch, 128) >= 256:
        tile = max(128, (tile // 2) // 128 * 128)
    return tile


def normalized_contrastive_loss(features, labels, temperature=0.5, *,
                                use_bf16_matmul=True):
    """Pallas TPU implementation of NormalizedContrastiveLoss.forward."""
    f = jnp.asarray(features, jnp.float32)
    labels = jnp.asarray(labels, jnp.int32)
    B, D = f.shape

    # ---- O(B)/O(B*D) scalar pieces, computed once in the wrapper -----------
    # Positive-pair count from the UN-padded labels:  sum_l c_l^2 - B.
    sorted_l = jnp.sort(labels)
    per_elem = (jnp.searchsorted(sorted_l, sorted_l, side="right")
                - jnp.searchsorted(sorted_l, sorted_l, side="left"))
    pos_cnt = jnp.sum(per_elem.astype(jnp.float32)) - jnp.float32(B)

    # F.normalize(x, dim=1) once:  x * rsqrt(max(|x|^2, eps^2)).
    fn = f * lax.rsqrt(jnp.maximum(jnp.sum(f * f, axis=1, keepdims=True), _EPS_SQ))

    # MXU operand dtype: bf16 by default (native single-pass matmul, f32 acc).
    mxu_dtype = jnp.bfloat16 if use_bf16_matmul else jnp.float32
    fn_mxu = fn.astype(mxu_dtype)
    # Exact diagonal sum of the kernel's similarity matrix, computed from the
    # SAME operands the MXU sees, so the analytic diagonal removal cancels.
    diag_sum = jnp.sum(jnp.square(fn_mxu.astype(jnp.float32)))

    # ---- padding & tiling ----------------------------------------------------
    Dp = _round_up(max(D, 1), 128)            # lane / contraction axis
    tile = _choose_tile(B, Dp)
    Bp = _round_up(B, tile)
    n = Bp // tile

    fn_p = jnp.pad(fn_mxu, ((0, Bp - B), (0, Dp - D)))
    lab_p = jnp.pad(labels, (0, Bp - B))
    labels_col = lab_p.reshape(Bp, 1)         # sublane-major column form
    labels_row = lab_p.reshape(1, Bp)         # lane-major row (no in-kernel transpose)

    # ---- VMEM budget (raise v5e's 16 MiB default; stay under v7x's 64 MiB) --
    in_item = jnp.dtype(mxu_dtype).itemsize
    vmem_est = (2 * 2 * tile * Dp * in_item   # fi + fj, double-buffered
                + 2 * tile * 128 * 4          # lane-dense psum block
                + 4 * tile * tile * 4)        # sim / mask temporaries
    vmem_limit = int(min(max(32 * 1024 * 1024, 2 * vmem_est), 56 * 1024 * 1024))

    psum = pl.pallas_call(
        _ncl_tile_kernel,
        grid_spec=pltpu.PrefetchScalarGridSpec(
            num_scalar_prefetch=0,
            grid=(n, n),
            in_specs=[
                pl.BlockSpec((tile, Dp), lambda i, j: (i, 0)),   # row-tile fn
                # TODO(synk): if profiling shows exposed DMA between j-steps at
                # small D, add pipeline_mode=pl.Buffered(3) on this column spec.
                pl.BlockSpec((tile, Dp), lambda i, j: (j, 0)),   # col-tile fn
                pl.BlockSpec((tile, 1), lambda i, j: (i, 0)),    # labels (col)
                pl.BlockSpec((1, tile), lambda i, j: (0, j)),    # labels (row)
            ],
            out_specs=pl.BlockSpec((tile, 128), lambda i, j: (i, 0)),
        ),
        out_shape=jax.ShapeDtypeStruct((Bp, 128), jnp.float32),
        compiler_params=pltpu.CompilerParams(
            dimension_semantics=("parallel", "arbitrary"),
            vmem_limit_bytes=vmem_limit),
    )(fn_p, fn_p, labels_col, labels_row)

    # ---- scalar epilogue -----------------------------------------------------
    # Full-matrix masked sim sum (diag included) -> remove the diagonal, apply
    # the temperature ONCE to the scalar, then mean / empty-mask branch.
    pos_sum = (jnp.sum(psum) - diag_sum) / jnp.float32(temperature)
    return jnp.where(pos_cnt > 0.0,
                     1.0 - pos_sum / jnp.maximum(pos_cnt, 1.0),
                     jnp.float32(0.0))


def _reference(features, labels, temperature=0.5):
    # Pure-JAX reference mirroring the PyTorch module.
    f = jnp.asarray(features, jnp.float32)
    norm = jnp.sqrt(jnp.sum(f * f, axis=1, keepdims=True))
    fn = f / jnp.maximum(norm, 1e-12)
    sim = (fn @ fn.T) / temperature
    lab = jnp.asarray(labels).reshape(-1, 1)
    mask = (lab == lab.T).astype(jnp.float32) * (1.0 - jnp.eye(f.shape[0], dtype=jnp.float32))
    cnt = jnp.sum(mask)
    return jnp.where(cnt > 0, 1.0 - jnp.sum(sim * mask) / jnp.maximum(cnt, 1.0), 0.0)


if __name__ == "__main__":
    key = jax.random.PRNGKey(0)
    k1, k2, k3 = jax.random.split(key, 3)

    # Case 1: tiny batch, mixed labels (single-tile path).
    B, D = 8, 32
    features = jax.random.normal(k1, (B, D), dtype=jnp.float32)
    labels = jnp.array([0, 1, 0, 1, 2, 2, 0, 1], dtype=jnp.int32)
    ref = _reference(features, labels, 0.5)
    loss_f32 = jax.block_until_ready(
        normalized_contrastive_loss(features, labels, 0.5, use_bf16_matmul=False))
    assert jnp.allclose(loss_f32, ref, atol=5e-5, rtol=5e-5), (loss_f32, ref)
    loss_bf16 = jax.block_until_ready(
        normalized_contrastive_loss(features, labels, 0.5))   # bf16 MXU default
    assert jnp.allclose(loss_bf16, ref, atol=2e-2, rtol=2e-2), (loss_bf16, ref)

    # Case 2: no positive pairs -> loss must be 0.0 (matches the PyTorch branch).
    labels_distinct = jnp.arange(B, dtype=jnp.int32)
    loss0 = jax.block_until_ready(
        normalized_contrastive_loss(features, labels_distinct, 0.5))
    assert jnp.allclose(loss0, 0.0, atol=1e-6), loss0

    # Case 3: larger, non-aligned batch and feature dim (tiled grid, symmetry,
    # B- and D-padding paths all exercised).
    B2, D2 = 600, 200
    f2 = jax.random.normal(k2, (B2, D2), dtype=jnp.float32)
    l2 = jax.random.randint(k3, (B2,), 0, 5, dtype=jnp.int32)
    ref2 = _reference(f2, l2, 0.5)
    loss2_f32 = jax.block_until_ready(
        normalized_contrastive_loss(f2, l2, 0.5, use_bf16_matmul=False))
    assert jnp.allclose(loss2_f32, ref2, atol=1e-4, rtol=1e-4), (loss2_f32, ref2)
    loss2_bf16 = jax.block_until_ready(
        normalized_contrastive_loss(f2, l2, 0.5))
    assert jnp.allclose(loss2_bf16, ref2, atol=2e-2, rtol=2e-2), (loss2_bf16, ref2)

    print("KERNEL_OK")
</pallas_src>

<mosaic_0001>
module attributes {stable_mosaic.version = 11 : i64} {
  func.func @_ncl_tile_kernel(%arg0: i32, %arg1: i32, %arg2: memref<128x128xf32, #tpu.memory_space<vmem>>, %arg3: memref<128x128xf32, #tpu.memory_space<vmem>>, %arg4: memref<128x1xi32, #tpu.memory_space<vmem>>, %arg5: memref<1x128xi32, #tpu.memory_space<vmem>>, %arg6: memref<128x128xf32, #tpu.memory_space<vmem>>) attributes {dimension_semantics = [#tpu.dimension_semantics<parallel>, #tpu.dimension_semantics<arbitrary>], iteration_bounds = array<i64: 1, 1>, scalar_prefetch = 0 : i64, scratch_operands = 0 : i64, tpu.core_type = #tpu.core_type<tc>, window_params = [{transform_indices = @transform_0, window_bounds = array<i64: 128, 128>}, {transform_indices = @transform_1, window_bounds = array<i64: 128, 128>}, {transform_indices = @transform_2, window_bounds = array<i64: 128, 1>}, {transform_indices = @transform_3, window_bounds = array<i64: 1, 128>}, {transform_indices = @transform_4, window_bounds = array<i64: 128, 128>}]} {
    %c0_i32 = arith.constant 0 : i32
    %0 = arith.cmpi eq, %arg1, %c0_i32 : i32
    %1 = arith.extui %0 : i1 to i32
    %c0_i32_0 = arith.constant 0 : i32
    %2 = arith.cmpi ne, %1, %c0_i32_0 : i32
    scf.if %2 {
      %cst = arith.constant 0.000000e+00 : f32
      %6 = vector.broadcast %cst : f32 to vector<128x128xf32>
      %c0 = arith.constant 0 : index
      %c0_2 = arith.constant 0 : index
      %7 = vector.load %arg6[%c0, %c0_2] : memref<128x128xf32, #tpu.memory_space<vmem>>, vector<128x128xf32>
      tpu.vector_store %arg6[%c0, %c0_2], %6 {strides = array<i32>} : memref<128x128xf32, #tpu.memory_space<vmem>>, vector<128x128xf32>,
    } else {
    }
    %3 = arith.cmpi sge, %arg1, %arg0 : i32
    %4 = arith.extui %3 : i1 to i32
    %c0_i32_1 = arith.constant 0 : i32
    %5 = arith.cmpi ne, %4, %c0_i32_1 : i32
    scf.if %5 {
      %c0 = arith.constant 0 : index
      %c0_2 = arith.constant 0 : index
      %6 = vector.load %arg2[%c0, %c0_2] : memref<128x128xf32, #tpu.memory_space<vmem>>, vector<128x128xf32>
      %c0_3 = arith.constant 0 : index
      %c0_4 = arith.constant 0 : index
      %7 = vector.load %arg3[%c0_3, %c0_4] : memref<128x128xf32, #tpu.memory_space<vmem>>, vector<128x128xf32>
      %cst = arith.constant dense<0.000000e+00> : vector<128x128xf32>
      %8 = tpu.matmul %6, %7, %cst {dimension_numbers = #tpu.dot_dimension_numbers<[1], [1], [0], [0], [0, 0, 1, 0], [], []>} : vector<128x128xf32>, vector<128x128xf32>, vector<128x128xf32> -> vector<128x128xf32>
      %c0_5 = arith.constant 0 : index
      %c0_6 = arith.constant 0 : index
      %9 = vector.load %arg4[%c0_5, %c0_6] : memref<128x1xi32, #tpu.memory_space<vmem>>, vector<128x1xi32>
      %c0_7 = arith.constant 0 : index
      %c0_8 = arith.constant 0 : index
      %10 = vector.load %arg5[%c0_7, %c0_8] : memref<1x128xi32, #tpu.memory_space<vmem>>, vector<1x128xi32>
      %11 = vector.broadcast %9 : vector<128x1xi32> to vector<128x128xi32>
      %12 = vector.broadcast %10 : vector<1x128xi32> to vector<128x128xi32>
      %13 = arith.cmpi eq, %11, %12 : vector<128x128xi32>
      %cst_9 = arith.constant 0.000000e+00 : f32
      %14 = vector.broadcast %cst_9 : f32 to vector<128x128xf32>
      %15 = arith.select %13, %8, %14 : vector<128x128xi1>, vector<128x128xf32>
      %16 = arith.cmpi eq, %arg1, %arg0 : i32
      %cst_10 = arith.constant 1.000000e+00 : f32
      %cst_11 = arith.constant 2.000000e+00 : f32
      %17 = arith.select %16, %cst_10, %cst_11 : f32
      %c0_12 = arith.constant 0 : index
      %c0_13 = arith.constant 0 : index
      %18 = vector.load %arg6[%c0_12, %c0_13] : memref<128x128xf32, #tpu.memory_space<vmem>>, vector<128x128xf32>
      %19 = vector.broadcast %17 : f32 to vector<128x128xf32>
      %20 = arith.mulf %19, %15 : vector<128x128xf32>
      %21 = arith.addf %18, %20 : vector<128x128xf32>
      %c0_14 = arith.constant 0 : index
      %c0_15 = arith.constant 0 : index
      %22 = vector.load %arg6[%c0_14, %c0_15] : memref<128x128xf32, #tpu.memory_space<vmem>>, vector<128x128xf32>
      tpu.vector_store %arg6[%c0_14, %c0_15], %21 {strides = array<i32>} : memref<128x128xf32, #tpu.memory_space<vmem>>, vector<128x128xf32>,
    } else {
    }
    return
  }
  func.func @transform_0(%arg0: i32, %arg1: i32) -> (i32, i32) {
    %c0_i32 = arith.constant 0 : i32
    %c0_i32_0 = arith.constant 0 : i32
    return %arg0, %c0_i32 : i32, i32
  }
  func.func @transform_1(%arg0: i32, %arg1: i32) -> (i32, i32) {
    %c0_i32 = arith.constant 0 : i32
    %c0_i32_0 = arith.constant 0 : i32
    return %arg1, %c0_i32 : i32, i32
  }
  func.func @transform_2(%arg0: i32, %arg1: i32) -> (i32, i32) {
    %c0_i32 = arith.constant 0 : i32
    %c0_i32_0 = arith.constant 0 : i32
    return %arg0, %c0_i32 : i32, i32
  }
  func.func @transform_3(%arg0: i32, %arg1: i32) -> (i32, i32) {
    %c0_i32 = arith.constant 0 : i32
    %c0_i32_0 = arith.constant 0 : i32
    return %c0_i32, %arg1 : i32, i32
  }
  func.func @transform_4(%arg0: i32, %arg1: i32) -> (i32, i32) {
    %c0_i32 = arith.constant 0 : i32
    %c0_i32_0 = arith.constant 0 : i32
    return %arg0, %c0_i32 : i32, i32
  }
}

</mosaic_0001>

<llo_original>
// kernel: tpu_custom_call.1
$region0: #{tpu_custom_call.1}
  #allocation0 [shape = 'u32[]', space=smem, size = 0x4, offset = 0x4, fixed_abs, tag = 'smem constant byte address 0x4 - core index']
  #allocation1 [shape = 'u32[144,128]{1,0:T(1,128)}', space=vmem, size = 0x12000, scoped, tag = 'internal scratch']
  %s0 = inlined_call_operand.vmem [shape: f32[128,128], index: 0, kind: input, shape index: {}]
  %s1 = inlined_call_operand.hbm [shape: f32[128,128], index: 1, kind: input, shape index: {}]
  %s2 = inlined_call_operand.vmem [shape: s32[128,1], index: 2, kind: input, shape index: {}]
  %s3 = inlined_call_operand.vmem [shape: s32[1,128], index: 3, kind: input, shape index: {}]
  %s4 = inlined_call_operand.hbm [shape: f32[128,128], index: 4, kind: output, shape index: {}]
  %s5 = sld [smem:[#allocation0]]
  $region38: #{tpu_custom_call.1} parent=0
    _
  %s7 = ssub.s32 1, %s5
  %s8 = scalar_select 0, %s7, %s5
  $region1: #{tpu_custom_call.1} parent=0
    #allocation2 [shape = 'u8[65536]{0}', space=vmem, size = 0x10000, scoped, tag = 'input window, operand 1, single buffered']
    #allocation3 [shape = 's32[1]{0}', space=sflag, size = 0x4, scoped, tag = 'scoped memory for tpu_custom_call.1']
    #allocation4 [shape = 's32[1]{0}', space=sflag, size = 0x4, scoped, tag = 'scoped memory for tpu_custom_call.1']
    #allocation5 [shape = 'u8[65536]{0}', space=vmem, size = 0x10000, scoped, tag = 'output window, operand 0, single buffered']
    %9 = vsyncpa [#allocation3], 0
    %10 = vsyncpa [#allocation4], 0
    // Predicated region
    $region2: #{tpu_custom_call.1} parent=1 // pred_check
      _
    $region3: #{tpu_custom_call.1} parent=1 // pred_check_branch
      %12 = sbr.rel (0) target = $region5
    $region4: #{tpu_custom_call.1} parent=1 // pred_region
      _
    $region5: #{tpu_custom_call.1} parent=1 // pred_fallthru
      _
    // Predicated region
    $region6: #{tpu_custom_call.1} parent=1 // pred_check
      _
    $region7: #{tpu_custom_call.1} parent=1 // pred_check_branch
      %14 = sbr.rel (0) target = $region9
    $region8: #{tpu_custom_call.1} parent=1 // pred_region
      %s16 = ssub.s32 2048, 2048
      %17 = vsyncadd [#allocation3], %s16
      %s18 = sshll.u32 [#allocation2], 4
      %s19 = int_to_ptr.vmem [resolvable:$true] %s18
      %24 = dma.hbm_to_vmem [thread:$0]  %s1, 2048, %s19, [#allocation3], 128, 128, 8
    $region9: #{tpu_custom_call.1} parent=1 // pred_fallthru
      _
    // Predicated region
    $region10: #{tpu_custom_call.1} parent=1 // pred_check
      _
    $region11: #{tpu_custom_call.1} parent=1 // pred_check_branch
      %26 = sbr.rel (0) target = $region13
    $region12: #{tpu_custom_call.1} parent=1 // pred_region
      _
    $region13: #{tpu_custom_call.1} parent=1 // pred_fallthru
      _
    // Predicated region
    $region14: #{tpu_custom_call.1} parent=1 // pred_check
      _
    $region15: #{tpu_custom_call.1} parent=1 // pred_check_branch
      %28 = sbr.rel (0) target = $region17
    $region16: #{tpu_custom_call.1} parent=1 // pred_region
      _
    $region17: #{tpu_custom_call.1} parent=1 // pred_fallthru
      _
    // Predicated region
    $region18: #{tpu_custom_call.1} parent=1 // pred_check
      _
    $region19: #{tpu_custom_call.1} parent=1 // pred_check_branch
      %30 = sbr.rel (0) target = $region21
    $region20: #{tpu_custom_call.1} parent=1 // pred_region
      %31 = dma.done [#allocation3], 2048
    $region21: #{tpu_custom_call.1} parent=1 // pred_fallthru
      _
    %p32 = scmp.eq.s32.totalorder 0, 0
    // Predicated region
    $region22: #{tpu_custom_call.1} parent=1 // pred_check
      %p33 = pneg %p32
    $region23: #{tpu_custom_call.1} parent=1 // pred_check_branch
      %35 = sbr.rel (%p33) target = $region25
    $region24: #{tpu_custom_call.1} parent=1 // pred_region
      %36 = vst [vmem:[#allocation5] sm:$0xff] 0.0
      %37 = vst [vmem:[#allocation5 + $0x8] sm:$0xff] 0.0
      %38 = vst [vmem:[#allocation5 + $0x10] sm:$0xff] 0.0
      %39 = vst [vmem:[#allocation5 + $0x18] sm:$0xff] 0.0
      %40 = vst [vmem:[#allocation5 + $0x20] sm:$0xff] 0.0
      %41 = vst [vmem:[#allocation5 + $0x28] sm:$0xff] 0.0
      %42 = vst [vmem:[#allocation5 + $0x30] sm:$0xff] 0.0
      %43 = vst [vmem:[#allocation5 + $0x38] sm:$0xff] 0.0
      %44 = vst [vmem:[#allocation5 + $0x40] sm:$0xff] 0.0
      %45 = vst [vmem:[#allocation5 + $0x48] sm:$0xff] 0.0
      %46 = vst [vmem:[#allocation5 + $0x50] sm:$0xff] 0.0
      %47 = vst [vmem:[#allocation5 + $0x58] sm:$0xff] 0.0
      %48 = vst [vmem:[#allocation5 + $0x60] sm:$0xff] 0.0
      %49 = vst [vmem:[#allocation5 + $0x68] sm:$0xff] 0.0
      %50 = vst [vmem:[#allocation5 + $0x70] sm:$0xff] 0.0
      %51 = vst [vmem:[#allocation5 + $0x78] sm:$0xff] 0.0
    $region25: #{tpu_custom_call.1} parent=1 // pred_fallthru
      _
    %p52 = scmp.ge.s32.totalorder 0, 0
    // Predicated region
    $region26: #{tpu_custom_call.1} parent=1 // pred_check
      %p53 = pneg %p52
    $region27: #{tpu_custom_call.1} parent=1 // pred_check_branch
      %55 = sbr.rel (%p53) target = $region29
    $region28: #{tpu_custom_call.1} parent=1 // pred_region
      %v56 = vld [vmem:[%s0] sm:$0xff]
      %v57 = vld [vmem:[%s0 + $0x8] sm:$0xff]
      %v58 = vld [vmem:[%s0 + $0x10] sm:$0xff]
      %v59 = vld [vmem:[%s0 + $0x18] sm:$0xff]
      %v60 = vld [vmem:[%s0 + $0x20] sm:$0xff]
      %v61 = vld [vmem:[%s0 + $0x28] sm:$0xff]
      %v62 = vld [vmem:[%s0 + $0x30] sm:$0xff]
      %v63 = vld [vmem:[%s0 + $0x38] sm:$0xff]
      %v64 = vld [vmem:[%s0 + $0x40] sm:$0xff]
      %v65 = vld [vmem:[%s0 + $0x48] sm:$0xff]
      %v66 = vld [vmem:[%s0 + $0x50] sm:$0xff]
      %v67 = vld [vmem:[%s0 + $0x58] sm:$0xff]
      %v68 = vld [vmem:[%s0 + $0x60] sm:$0xff]
      %v69 = vld [vmem:[%s0 + $0x68] sm:$0xff]
      %v70 = vld [vmem:[%s0 + $0x70] sm:$0xff]
      %v71 = vld [vmem:[%s0 + $0x78] sm:$0xff]
      %v72 = vld [vmem:[#allocation2] sm:$0xff]
      %v73 = vld [vmem:[#allocation2 + $0x8] sm:$0xff]
      %v74 = vld [vmem:[#allocation2 + $0x10] sm:$0xff]
      %v75 = vld [vmem:[#allocation2 + $0x18] sm:$0xff]
      %v76 = vld [vmem:[#allocation2 + $0x20] sm:$0xff]
      %v77 = vld [vmem:[#allocation2 + $0x28] sm:$0xff]
      %v78 = vld [vmem:[#allocation2 + $0x30] sm:$0xff]
      %v79 = vld [vmem:[#allocation2 + $0x38] sm:$0xff]
      %v80 = vld [vmem:[#allocation2 + $0x40] sm:$0xff]
      %v81 = vld [vmem:[#allocation2 + $0x48] sm:$0xff]
      %v82 = vld [vmem:[#allocation2 + $0x50] sm:$0xff]
      %v83 = vld [vmem:[#allocation2 + $0x58] sm:$0xff]
      %v84 = vld [vmem:[#allocation2 + $0x60] sm:$0xff]
      %v85 = vld [vmem:[#allocation2 + $0x68] sm:$0xff]
      %v86 = vld [vmem:[#allocation2 + $0x70] sm:$0xff]
      %v87 = vld [vmem:[#allocation2 + $0x78] sm:$0xff]
      %88 = vmatprep.subr.mxu0 0.0
      %89 = vmatpush1.xpose.msra.mxu0 %v72
      %90 = vmatprep.subr.mxu0 0.0
      %91 = vmatpush1.xpose.msra.mxu0 %v73
      %92 = vmatprep.subr.mxu0 0.0
      %93 = vmatpush1.xpose.msra.mxu0 %v74
      %94 = vmatprep.subr.mxu0 0.0
      %95 = vmatpush1.xpose.msra.mxu0 %v75
      %96 = vmatprep.subr.mxu0 0.0
      %97 = vmatpush1.xpose.msra.mxu0 %v76
      %98 = vmatprep.subr.mxu0 0.0
      %99 = vmatpush1.xpose.msra.mxu0 %v77
      %100 = vmatprep.subr.mxu0 0.0
      %101 = vmatpush1.xpose.msra.mxu0 %v78
      %102 = vmatprep.subr.mxu0 0.0
      %103 = vmatpush1.xpose.msra.mxu0 %v79
      %104 = vmatprep.subr.mxu0 0.0
      %105 = vmatpush1.xpose.msra.mxu0 %v80
      %106 = vmatprep.subr.mxu0 0.0
      %107 = vmatpush1.xpose.msra.mxu0 %v81
      %108 = vmatprep.subr.mxu0 0.0
      %109 = vmatpush1.xpose.msra.mxu0 %v82
      %110 = vmatprep.subr.mxu0 0.0
      %111 = vmatpush1.xpose.msra.mxu0 %v83
      %112 = vmatprep.subr.mxu0 0.0
      %113 = vmatpush1.xpose.msra.mxu0 %v84
      %114 = vmatprep.subr.mxu0 0.0
      %115 = vmatpush1.xpose.msra.mxu0 %v85
      %116 = vmatprep.subr.mxu0 0.0
      %117 = vmatpush1.xpose.msra.mxu0 %v86
      %118 = vmatprep.subr.mxu0 0.0
      %119 = vmatpush1.xpose.msra.mxu0 %v87
      %120 = vmatprep.subr.mxu0 0.0
      %121 = vmatpush1.xpose.msra.mxu0 0.0
      %122 = vmatprep.subr.mxu0 0.0
      %123 = vmatpush1.xpose.msra.mxu0 0.0
      %124 = vmatprep.subr.mxu0 0.0
      %125 = vmatpush1.xpose.msra.mxu0 0.0
      %126 = vmatprep.subr.mxu0 0.0
      %127 = vmatpush1.xpose.msra.mxu0 0.0
      %128 = vmatprep.subr.mxu0 0.0
      %129 = vmatpush1.xpose.msra.mxu0 0.0
      %130 = vmatprep.subr.mxu0 0.0
      %131 = vmatpush1.xpose.msra.mxu0 0.0
      %132 = vmatprep.subr.mxu0 0.0
      %133 = vmatpush1.xpose.msra.mxu0 0.0
      %134 = vmatprep.subr.mxu0 0.0
      %135 = vmatpush1.xpose.msra.mxu0 0.0
      %136 = vmatprep.subr.mxu0 0.0
      %137 = vmatpush1.xpose.msra.mxu0 0.0
      %138 = vmatprep.subr.mxu0 0.0
      %139 = vmatpush1.xpose.msra.mxu0 0.0
      %140 = vmatprep.subr.mxu0 0.0
      %141 = vmatpush1.xpose.msra.mxu0 0.0
      %142 = vmatprep.subr.mxu0 0.0
      %143 = vmatpush1.xpose.msra.mxu0 0.0
      %144 = vmatprep.subr.mxu0 0.0
      %145 = vmatpush1.xpose.msra.mxu0 0.0
      %146 = vmatprep.subr.mxu0 0.0
      %147 = vmatpush1.xpose.msra.mxu0 0.0
      %148 = vmatprep.subr.mxu0 0.0
      %149 = vmatpush1.xpose.msra.mxu0 0.0
      %150 = vmatprep.subr.mxu0 0.0
      %151 = vmatpush1.xpose.msra.mxu0 0.0
      %152 = vmatprep.mubr.f32.mxu0 0.0
      %153 = vmatmul.mubr.f32.gmra.mrb[0].mxu0 %v56
      %v154 = vpop.f32.mrb[0].mxu0
      %v155 = vadd.f32 0.0, %v154
      %v156 = vpop.f32.mrb[0].mxu0
      %157 = vmatprep.mubr.f32.mxu0 0.0
      %158 = vmatmul.mubr.f32.gmra.mrb[0].mxu0 %v57
      %v159 = vpop.f32.mrb[0].mxu0
      %v160 = vadd.f32 0.0, %v159
      %v161 = vpop.f32.mrb[0].mxu0
      %162 = vmatprep.mubr.f32.mxu0 0.0
      %163 = vmatmul.mubr.f32.gmra.mrb[0].mxu0 %v58
      %v164 = vpop.f32.mrb[0].mxu0
      %v165 = vadd.f32 0.0, %v164
      %v166 = vpop.f32.mrb[0].mxu0
      %167 = vmatprep.mubr.f32.mxu0 0.0
      %168 = vmatmul.mubr.f32.gmra.mrb[0].mxu0 %v59
      %v169 = vpop.f32.mrb[0].mxu0
      %v170 = vadd.f32 0.0, %v169
      %v171 = vpop.f32.mrb[0].mxu0
      %172 = vmatprep.mubr.f32.mxu0 0.0
      %173 = vmatmul.mubr.f32.gmra.mrb[0].mxu0 %v60
      %v174 = vpop.f32.mrb[0].mxu0
      %v175 = vadd.f32 0.0, %v174
      %v176 = vpop.f32.mrb[0].mxu0
      %177 = vmatprep.mubr.f32.mxu0 0.0
      %178 = vmatmul.mubr.f32.gmra.mrb[0].mxu0 %v61
      %v179 = vpop.f32.mrb[0].mxu0
      %v180 = vadd.f32 0.0, %v179
      %v181 = vpop.f32.mrb[0].mxu0
      %182 = vmatprep.mubr.f32.mxu0 0.0
      %183 = vmatmul.mubr.f32.gmra.mrb[0].mxu0 %v62
      %v184 = vpop.f32.mrb[0].mxu0
      %v185 = vadd.f32 0.0, %v184
      %v186 = vpop.f32.mrb[0].mxu0
      %187 = vmatprep.mubr.f32.mxu0 0.0
      %188 = vmatmul.mubr.f32.gmra.mrb[0].mxu0 %v63
      %v189 = vpop.f32.mrb[0].mxu0
      %v190 = vadd.f32 0.0, %v189
      %v191 = vpop.f32.mrb[0].mxu0
      %192 = vmatprep.mubr.f32.mxu0 0.0
      %193 = vmatmul.mubr.f32.gmra.mrb[0].mxu0 %v64
      %v194 = vpop.f32.mrb[0].mxu0
      %v195 = vadd.f32 0.0, %v194
      %v196 = vpop.f32.mrb[0].mxu0
      %197 = vmatprep.mubr.f32.mxu0 0.0
      %198 = vmatmul.mubr.f32.gmra.mrb[0].mxu0 %v65
      %v199 = vpop.f32.mrb[0].mxu0
      %v200 = vadd.f32 0.0, %v199
      %v201 = vpop.f32.mrb[0].mxu0
      %202 = vmatprep.mubr.f32.mxu0 0.0
      %203 = vmatmul.mubr.f32.gmra.mrb[0].mxu0 %v66
      %v204 = vpop.f32.mrb[0].mxu0
      %v205 = vadd.f32 0.0, %v204
      %v206 = vpop.f32.mrb[0].mxu0
      %207 = vmatprep.mubr.f32.mxu0 0.0
      %208 = vmatmul.mubr.f32.gmra.mrb[0].mxu0 %v67
      %v209 = vpop.f32.mrb[0].mxu0
      %v210 = vadd.f32 0.0, %v209
      %v211 = vpop.f32.mrb[0].mxu0
      %212 = vmatprep.mubr.f32.mxu0 0.0
      %213 = vmatmul.mubr.f32.gmra.mrb[0].mxu0 %v68
      %v214 = vpop.f32.mrb[0].mxu0
      %v215 = vadd.f32 0.0, %v214
      %v216 = vpop.f32.mrb[0].mxu0
      %217 = vmatprep.mubr.f32.mxu0 0.0
      %218 = vmatmul.mubr.f32.gmra.mrb[0].mxu0 %v69
      %v219 = vpop.f32.mrb[0].mxu0
      %v220 = vadd.f32 0.0, %v219
      %v221 = vpop.f32.mrb[0].mxu0
      %222 = vmatprep.mubr.f32.mxu0 0.0
      %223 = vmatmul.mubr.f32.gmra.mrb[0].mxu0 %v70
      %v224 = vpop.f32.mrb[0].mxu0
      %v225 = vadd.f32 0.0, %v224
      %v226 = vpop.f32.mrb[0].mxu0
      %227 = vmatprep.mubr.f32.mxu0 0.0
      %228 = vmatmul.mubr.f32.gmra.mrb[0].mxu0 %v71
      %v229 = vpop.f32.mrb[0].mxu0
      %v230 = vadd.f32 0.0, %v229
      %v231 = vpop.f32.mrb[0].mxu0
      %232 = vdwg.mxu0
      %v233 = vld [vmem:[%s2] sm:$0xff]
      %v234 = vld [vmem:[%s2 + $0x8] sm:$0xff]
      %v235 = vld [vmem:[%s2 + $0x10] sm:$0xff]
      %v236 = vld [vmem:[%s2 + $0x18] sm:$0xff]
      %v237 = vld [vmem:[%s2 + $0x20] sm:$0xff]
      %v238 = vld [vmem:[%s2 + $0x28] sm:$0xff]
      %v239 = vld [vmem:[%s2 + $0x30] sm:$0xff]
      %v240 = vld [vmem:[%s2 + $0x38] sm:$0xff]
      %v241 = vld [vmem:[%s2 + $0x40] sm:$0xff]
      %v242 = vld [vmem:[%s2 + $0x48] sm:$0xff]
      %v243 = vld [vmem:[%s2 + $0x50] sm:$0xff]
      %v244 = vld [vmem:[%s2 + $0x58] sm:$0xff]
      %v245 = vld [vmem:[%s2 + $0x60] sm:$0xff]
      %v246 = vld [vmem:[%s2 + $0x68] sm:$0xff]
      %v247 = vld [vmem:[%s2 + $0x70] sm:$0xff]
      %v248 = vld [vmem:[%s2 + $0x78] sm:$0xff]
      %v249 = vld [vmem:[%s3] sm:$0x1]
      %250 = vset.pattern.permute.xlu0 0
      %251 = vperm.xlu0 %250, %v233
      %v252 = vpop.permute.xlu0 %251
      %253 = vset.pattern.permute.xlu0 0
      %254 = vperm.xlu0 %253, %v234
      %v255 = vpop.permute.xlu0 %254
      %256 = vset.pattern.permute.xlu0 0
      %257 = vperm.xlu0 %256, %v235
      %v258 = vpop.permute.xlu0 %257
      %259 = vset.pattern.permute.xlu0 0
      %260 = vperm.xlu0 %259, %v236
      %v261 = vpop.permute.xlu0 %260
      %262 = vset.pattern.permute.xlu0 0
      %263 = vperm.xlu0 %262, %v237
      %v264 = vpop.permute.xlu0 %263
      %265 = vset.pattern.permute.xlu0 0
      %266 = vperm.xlu0 %265, %v238
      %v267 = vpop.permute.xlu0 %266
      %268 = vset.pattern.permute.xlu0 0
      %269 = vperm.xlu0 %268, %v239
      %v270 = vpop.permute.xlu0 %269
      %271 = vset.pattern.permute.xlu0 0
      %272 = vperm.xlu0 %271, %v240
      %v273 = vpop.permute.xlu0 %272
      %274 = vset.pattern.permute.xlu0 0
      %275 = vperm.xlu0 %274, %v241
      %v276 = vpop.permute.xlu0 %275
      %277 = vset.pattern.permute.xlu0 0
      %278 = vperm.xlu0 %277, %v242
      %v279 = vpop.permute.xlu0 %278
      %280 = vset.pattern.permute.xlu0 0
      %281 = vperm.xlu0 %280, %v243
      %v282 = vpop.permute.xlu0 %281
      %283 = vset.pattern.permute.xlu0 0
      %284 = vperm.xlu0 %283, %v244
      %v285 = vpop.permute.xlu0 %284
      %286 = vset.pattern.permute.xlu0 0
      %287 = vperm.xlu0 %286, %v245
      %v288 = vpop.permute.xlu0 %287
      %289 = vset.pattern.permute.xlu0 0
      %290 = vperm.xlu0 %289, %v246
      %v291 = vpop.permute.xlu0 %290
      %292 = vset.pattern.permute.xlu0 0
      %293 = vperm.xlu0 %292, %v247
      %v294 = vpop.permute.xlu0 %293
      %295 = vset.pattern.permute.xlu0 0
      %296 = vperm.xlu0 %295, %v248
      %v297 = vpop.permute.xlu0 %296
      %v298 = vlaneseq
      %v299 = vshrl.u32 %v298, 7
      %v300 = vsub.s32 0, %v299
      %v301 = vrot.slane %v249, %v300
      %vm302 = vcmp.eq.s32.totalorder %v252, %v301
      %vm303 = vcmp.eq.s32.totalorder %v255, %v301
      %vm304 = vcmp.eq.s32.totalorder %v258, %v301
      %vm305 = vcmp.eq.s32.totalorder %v261, %v301
      %vm306 = vcmp.eq.s32.totalorder %v264, %v301
      %vm307 = vcmp.eq.s32.totalorder %v267, %v301
      %vm308 = vcmp.eq.s32.totalorder %v270, %v301
      %vm309 = vcmp.eq.s32.totalorder %v273, %v301
      %vm310 = vcmp.eq.s32.totalorder %v276, %v301
      %vm311 = vcmp.eq.s32.totalorder %v279, %v301
      %vm312 = vcmp.eq.s32.totalorder %v282, %v301
      %vm313 = vcmp.eq.s32.totalorder %v285, %v301
      %vm314 = vcmp.eq.s32.totalorder %v288, %v301
      %vm315 = vcmp.eq.s32.totalorder %v291, %v301
      %vm316 = vcmp.eq.s32.totalorder %v294, %v301
      %vm317 = vcmp.eq.s32.totalorder %v297, %v301
      %v318 = vsel %vm302, %v155, 0.0
      %v319 = vsel %vm303, %v160, 0.0
      %v320 = vsel %vm304, %v165, 0.0
      %v321 = vsel %vm305, %v170, 0.0
      %v322 = vsel %vm306, %v175, 0.0
      %v323 = vsel %vm307, %v180, 0.0
      %v324 = vsel %vm308, %v185, 0.0
      %v325 = vsel %vm309, %v190, 0.0
      %v326 = vsel %vm310, %v195, 0.0
      %v327 = vsel %vm311, %v200, 0.0
      %v328 = vsel %vm312, %v205, 0.0
      %v329 = vsel %vm313, %v210, 0.0
      %v330 = vsel %vm314, %v215, 0.0
      %v331 = vsel %vm315, %v220, 0.0
      %v332 = vsel %vm316, %v225, 0.0
      %v333 = vsel %vm317, %v230, 0.0
      %p334 = scmp.eq.s32.totalorder 0, 0
      %s335 = scalar_select %p334, 1.0, 2.0
      %v336 = vld [vmem:[#allocation5] sm:$0xff]
      %v337 = vld [vmem:[#allocation5 + $0x8] sm:$0xff]
      %v338 = vld [vmem:[#allocation5 + $0x10] sm:$0xff]
      %v339 = vld [vmem:[#allocation5 + $0x18] sm:$0xff]
      %v340 = vld [vmem:[#allocation5 + $0x20] sm:$0xff]
      %v341 = vld [vmem:[#allocation5 + $0x28] sm:$0xff]
      %v342 = vld [vmem:[#allocation5 + $0x30] sm:$0xff]
      %v343 = vld [vmem:[#allocation5 + $0x38] sm:$0xff]
      %v344 = vld [vmem:[#allocation5 + $0x40] sm:$0xff]
      %v345 = vld [vmem:[#allocation5 + $0x48] sm:$0xff]
      %v346 = vld [vmem:[#allocation5 + $0x50] sm:$0xff]
      %v347 = vld [vmem:[#allocation5 + $0x58] sm:$0xff]
      %v348 = vld [vmem:[#allocation5 + $0x60] sm:$0xff]
      %v349 = vld [vmem:[#allocation5 + $0x68] sm:$0xff]
      %v350 = vld [vmem:[#allocation5 + $0x70] sm:$0xff]
      %v351 = vld [vmem:[#allocation5 + $0x78] sm:$0xff]
      %v352 = vstv %s335
      %v353 = vmul.f32 %v352, %v318
      %v354 = vmul.f32 %v352, %v319
      %v355 = vmul.f32 %v352, %v320
      %v356 = vmul.f32 %v352, %v321
      %v357 = vmul.f32 %v352, %v322
      %v358 = vmul.f32 %v352, %v323
      %v359 = vmul.f32 %v352, %v324
      %v360 = vmul.f32 %v352, %v325
      %v361 = vmul.f32 %v352, %v326
      %v362 = vmul.f32 %v352, %v327
      %v363 = vmul.f32 %v352, %v328
      %v364 = vmul.f32 %v352, %v329
      %v365 = vmul.f32 %v352, %v330
      %v366 = vmul.f32 %v352, %v331
      %v367 = vmul.f32 %v352, %v332
      %v368 = vmul.f32 %v352, %v333
      %v369 = vadd.f32 %v336, %v353
      %v370 = vadd.f32 %v337, %v354
      %v371 = vadd.f32 %v338, %v355
      %v372 = vadd.f32 %v339, %v356
      %v373 = vadd.f32 %v340, %v357
      %v374 = vadd.f32 %v341, %v358
      %v375 = vadd.f32 %v342, %v359
      %v376 = vadd.f32 %v343, %v360
      %v377 = vadd.f32 %v344, %v361
      %v378 = vadd.f32 %v345, %v362
      %v379 = vadd.f32 %v346, %v363
      %v380 = vadd.f32 %v347, %v364
      %v381 = vadd.f32 %v348, %v365
      %v382 = vadd.f32 %v349, %v366
      %v383 = vadd.f32 %v350, %v367
      %v384 = vadd.f32 %v351, %v368
      %385 = vst [vmem:[#allocation5] sm:$0xff] %v369
      %386 = vst [vmem:[#allocation5 + $0x8] sm:$0xff] %v370
      %387 = vst [vmem:[#allocation5 + $0x10] sm:$0xff] %v371
      %388 = vst [vmem:[#allocation5 + $0x18] sm:$0xff] %v372
      %389 = vst [vmem:[#allocation5 + $0x20] sm:$0xff] %v373
      %390 = vst [vmem:[#allocation5 + $0x28] sm:$0xff] %v374
      %391 = vst [vmem:[#allocation5 + $0x30] sm:$0xff] %v375
      %392 = vst [vmem:[#allocation5 + $0x38] sm:$0xff] %v376
      %393 = vst [vmem:[#allocation5 + $0x40] sm:$0xff] %v377
      %394 = vst [vmem:[#allocation5 + $0x48] sm:$0xff] %v378
      %395 = vst [vmem:[#allocation5 + $0x50] sm:$0xff] %v379
      %396 = vst [vmem:[#allocation5 + $0x58] sm:$0xff] %v380
      %397 = vst [vmem:[#allocation5 + $0x60] sm:$0xff] %v381
      %398 = vst [vmem:[#allocation5 + $0x68] sm:$0xff] %v382
      %399 = vst [vmem:[#allocation5 + $0x70] sm:$0xff] %v383
      %400 = vst [vmem:[#allocation5 + $0x78] sm:$0xff] %v384
    $region29: #{tpu_custom_call.1} parent=1 // pred_fallthru
      _
    // Predicated region
    $region30: #{tpu_custom_call.1} parent=1 // pred_check
      _
    $region31: #{tpu_custom_call.1} parent=1 // pred_check_branch
      %402 = sbr.rel (0) target = $region33
    $region32: #{tpu_custom_call.1} parent=1 // pred_region
      %s404 = ssub.s32 2048, 2048
      %405 = vsyncadd [#allocation4], %s404
      %s406 = sshll.u32 [#allocation5], 4
      %s407 = int_to_ptr.vmem [resolvable:$true] %s406
      %412 = dma.vmem_to_hbm [thread:$0]  %s407, 2048, %s4, [#allocation4], 128, 128, 8
    $region33: #{tpu_custom_call.1} parent=1 // pred_fallthru
      _
    // Predicated region
    $region34: #{tpu_custom_call.1} parent=1 // pred_check
      _
    $region35: #{tpu_custom_call.1} parent=1 // pred_check_branch
      %414 = sbr.rel (0) target = $region37
    $region36: #{tpu_custom_call.1} parent=1 // pred_region
      %415 = dma.done [#allocation4], 2048
    $region37: #{tpu_custom_call.1} parent=1 // pred_fallthru
      _
    %416 = vsyncpa [#allocation3], 1
    %417 = vsyncpa [#allocation4], 1

</llo_original>
